<compile_context>
chip_gen: v7x
topology: tpu7x:2x2x1
jax: 0.10.0
libtpu: 0.0.40
codegen_flags: <defaults>
</compile_context>

<pallas_src>
import functools

import jax
import jax.numpy as jnp
import numpy as np
from jax.experimental import pallas as pl
from jax.experimental.pallas import tpu as pltpu


def _round_up(v, m):
    return ((v + m - 1) // m) * m


def _vmem_limits():
    """(vmem_limit_bytes, per-tile VMEM budget) derived from the chip generation."""
    cap = 64 << 20                            # conservative default (v7x per-TC VMEM)
    try:
        info = pltpu.get_tpu_info()
        cap = int(getattr(info, "vmem_capacity_bytes", cap) or cap)
    except Exception:
        pass
    if cap <= (64 << 20):                     # v7x-class: 64 MiB per TensorCore
        return 38 << 20, 14 << 20
    return 64 << 20, 28 << 20                 # v5e / v6e: 128 MiB per TensorCore


# --------------- pass 1: activation + fused implicit-GEMM conv + IN stats -----
def _conv_stats_kernel(x_ref, halo_ref, w_ref, raw_ref, stats_ref, act_ref,
                       fused_ref, *, taps_by_phase, relu, tile_rows, out_w,
                       halo, k_tap, c_out):
    def act(v):                               # activation directly in bf16
        if relu:
            return jnp.maximum(v, 0.0)        # F.relu
        return jnp.where(v >= 0.0, v, v * 0.2)  # F.leaky_relu(x, 0.2)

    # Activated band + halo written once into a single bf16 VMEM scratch; all
    # tap windows below are sliced from it (no band-sized concatenate, no f32
    # activation temporaries).
    act_ref[0:tile_rows] = act(x_ref[0])
    act_ref[tile_rows:tile_rows + halo] = act(halo_ref[0])

    p_tile = tile_rows * out_w
    ssum = None
    ssq = None
    # One output phase at a time: gather its taps into one fused (p_tile, T*K)
    # bf16 operand and issue a single MXU matmul per phase; only one f32
    # accumulator (the dot result) is live at any time.
    for ph, taps in enumerate(taps_by_phase):
        for t, (dy, dx) in enumerate(taps):
            win = act_ref[dy:dy + tile_rows, dx:dx + out_w, :]
            fused_ref[:, t * k_tap:(t + 1) * k_tap] = win.reshape(p_tile, k_tap)
        acc = jnp.dot(fused_ref[...], w_ref[ph],
                      preferred_element_type=jnp.float32)      # (p_tile, co_pad)
        # Only the real Cout channels reach HBM (bf16 when followed by IN).
        raw_ref[0, ph] = acc[:, :c_out].astype(raw_ref.dtype)
        s = jnp.sum(acc, axis=0, keepdims=True)                # (1, co_pad)
        q = jnp.sum(acc * acc, axis=0, keepdims=True)
        ssum = s if ssum is None else ssum + s
        ssq = q if ssq is None else ssq + q
    # Per-row-tile partial statistics (reduced outside), so both grid axes stay
    # fully parallel (megacore / v7x two-TensorCore friendly).
    stats_ref[0, 0, 0:1] = ssum
    stats_ref[0, 0, 1:2] = ssq


def _conv_pass(xs, w_fused, *, taps_by_phase, relu, tile_rows, out_rows, out_w,
               halo, c_out, raw_dtype, vmem_limit):
    N, _, wp, k_tap = xs.shape
    n_phase, k_fused, co_pad = w_fused.shape
    n_row_tiles = out_rows // tile_rows
    p_tile = tile_rows * out_w
    p_total = out_rows * out_w
    halo_blocks = tile_rows // halo            # halo BlockSpec index scale

    kern = functools.partial(_conv_stats_kernel, taps_by_phase=taps_by_phase,
                             relu=relu, tile_rows=tile_rows, out_w=out_w,
                             halo=halo, k_tap=k_tap, c_out=c_out)

    raw_bytes = int(N * n_phase * p_total * c_out * jnp.dtype(raw_dtype).itemsize)
    cost = pl.CostEstimate(
        flops=int(2 * N * n_phase * p_total * k_fused * co_pad),
        transcendentals=0,
        bytes_accessed=int(2 * xs.size * xs.dtype.itemsize
                           + w_fused.size * w_fused.dtype.itemsize
                           + raw_bytes + N * n_row_tiles * 2 * co_pad * 4))

    raw, stats = pl.pallas_call(
        kern,
        out_shape=(
            jax.ShapeDtypeStruct((N, n_phase, p_total, c_out), raw_dtype),
            jax.ShapeDtypeStruct((N, n_row_tiles, 2, co_pad), jnp.float32),
        ),
        grid_spec=pltpu.PrefetchScalarGridSpec(
            num_scalar_prefetch=0,
            grid=(N, n_row_tiles),
            in_specs=[
                # main input row band for this tile
                pl.BlockSpec((1, tile_rows, wp, k_tap), lambda n, r: (n, r, 0, 0)),
                # halo rows just below the band (same HBM array, second view)
                pl.BlockSpec((1, halo, wp, k_tap),
                             lambda n, r: (n, (r + 1) * halo_blocks, 0, 0)),
                # fused per-phase weight matrices, resident
                pl.BlockSpec((n_phase, k_fused, co_pad), lambda n, r: (0, 0, 0)),
            ],
            out_specs=[
                pl.BlockSpec((1, n_phase, p_tile, c_out), lambda n, r: (n, 0, r, 0)),
                pl.BlockSpec((1, 1, 2, co_pad), lambda n, r: (n, r, 0, 0)),
            ],
            scratch_shapes=[
                pltpu.VMEM((tile_rows + halo, wp, k_tap), jnp.bfloat16),  # activated band
                pltpu.VMEM((p_tile, k_fused), jnp.bfloat16),              # fused window
            ],
        ),
        compiler_params=pltpu.CompilerParams(
            dimension_semantics=("parallel", "parallel"),
            vmem_limit_bytes=vmem_limit,
        ),
        cost_estimate=cost,
    )(xs, xs, w_fused)
    return raw, stats


# --------------------- pass 2: apply InstanceNorm from stats ------------------
def _apply_norm_kernel(mi_ref, raw_ref, o_ref):
    x = raw_ref[0].astype(jnp.float32)         # (chunk, Cout)
    mean = mi_ref[0, 0:1, :]                   # (1, Cout)
    inv = mi_ref[0, 1:2, :]
    o_ref[0] = ((x - mean) * inv).astype(o_ref.dtype)


def _norm_pass(raw, mi, *, tile_budget, vmem_limit):
    N, m, c = raw.shape
    # pure HBM streaming: pick the largest chunk that fits the budget
    c_vmem = max(_round_up(c, 128), 128)
    per_row = 2 * c_vmem * (raw.dtype.itemsize + 4)     # double-buffered in + out
    max_rows = max(8, tile_budget // per_row)
    if m <= max_rows:
        chunk = m
    else:
        chunk = m
        t = (max_rows // 8) * 8
        while t >= 8:
            if m % t == 0:
                chunk = t
                break
            t -= 8
    n_chunks = m // chunk

    cost = pl.CostEstimate(flops=2 * raw.size, transcendentals=0,
                           bytes_accessed=int(raw.size * raw.dtype.itemsize
                                              + raw.size * 4 + mi.size * 4))
    return pl.pallas_call(
        _apply_norm_kernel,
        out_shape=jax.ShapeDtypeStruct((N, m, c), jnp.float32),
        grid_spec=pltpu.PrefetchScalarGridSpec(
            num_scalar_prefetch=0,
            grid=(N, n_chunks),
            in_specs=[
                pl.BlockSpec((1, 2, c), lambda n, j: (n, 0, 0)),
                pl.BlockSpec((1, chunk, c), lambda n, j: (n, j, 0)),
            ],
            out_specs=pl.BlockSpec((1, chunk, c), lambda n, j: (n, j, 0)),
        ),
        compiler_params=pltpu.CompilerParams(
            dimension_semantics=("parallel", "parallel"),
            vmem_limit_bytes=vmem_limit,
        ),
        cost_estimate=cost,
    )(mi, raw)


# ------------------------------- tiling helpers --------------------------------
def _pick_tile_rows(out_rows, out_w, wp, k_tap, k_fused, n_phase, co_pad, c_out,
                    halo, raw_itemsize, budget_bytes):
    # VMEM model uses lane-padded widths (minor dims occupy full 128-lane tiles).
    k_vmem = max(_round_up(k_tap, 128), 128)
    kf_vmem = max(_round_up(k_fused, 128), 128)
    cr_vmem = max(_round_up(c_out, 128), 128)
    valid = [t for t in range(1, out_rows + 1)
             if out_rows % t == 0 and t % halo == 0
             and ((t * out_w) % 8 == 0 or t == out_rows)]
    if not valid:
        return out_rows

    def vmem_bytes(t):
        p = t * out_w
        band = 2 * t * wp * k_vmem * 2              # double-buffered bf16 band
        halo_b = 2 * halo * wp * k_vmem * 2         # double-buffered halo rows
        act = (t + halo) * wp * k_vmem * 2          # activated-band scratch
        fused = p * kf_vmem * 2                     # fused-window scratch
        wgt = n_phase * k_fused * co_pad * 2        # resident fused weights
        acc = 2 * p * co_pad * 4                    # live f32 dot result
        raw_o = 2 * n_phase * p * cr_vmem * raw_itemsize  # double-buffered out tile
        stats = 2 * 2 * co_pad * 4
        return band + halo_b + act + fused + wgt + acc + raw_o + stats

    fitting = [t for t in valid if vmem_bytes(t) <= budget_bytes]
    return max(fitting) if fitting else min(valid)


# ------------------------------- wrapper --------------------------------------
def block_unet1_forward(x, weight, *, upsample=False, relu=False, drop=False,
                        bn=True, tile_rows=None):
    """BlockUNet1.forward.  x: (N, Cin, H, W) f32 NCHW.
    weight: Conv2d (Cout, Cin, 4, 4) if not upsample, else ConvTranspose2d
    (Cin, Cout, 4, 4)."""
    N, c_in, H, W = x.shape
    assert H % 2 == 0 and W % 2 == 0, "even spatial dims expected (UNet blocks)"
    eps = 1e-5

    # NCHW -> NHWC + spatial zero pad of 1 (leaky_relu(0)=relu(0)=0, so padding
    # before the in-kernel activation is equivalent to PyTorch's conv padding).
    # A full UNet would keep NHWC end-to-end; the transposes exist only to match
    # the PyTorch NCHW interface.
    xp = jnp.pad(jnp.transpose(x, (0, 2, 3, 1)), ((0, 0), (1, 1), (1, 1), (0, 0)))

    if not upsample:
        c_out = weight.shape[0]
        out_rows, out_w = H // 2, W // 2
        n_phase, halo = 1, 1
        # space-to-depth(2): xs[n,I,J,(dy*2+dx)*Cin+c] = xp[n,2I+dy,2J+dx,c]
        hp, wp0 = H + 2, W + 2
        xs = xp.reshape(N, hp // 2, 2, wp0 // 2, 2, c_in)
        xs = xs.transpose(0, 1, 3, 2, 4, 5).reshape(N, hp // 2, wp0 // 2, 4 * c_in)
        k_tap = 4 * c_in
        # The 4 coarse taps (a,b) are fused along K, so the whole 4x4 conv is a
        # single matmul per output tile with K = 16*Cin.
        taps_by_phase = [[(a, b) for a in range(2) for b in range(2)]]
        parts = []
        for a in range(2):
            for b in range(2):
                wt = weight[:, :, 2 * a:2 * a + 2, 2 * b:2 * b + 2]  # (Co,Ci,2,2)
                parts.append(wt.transpose(2, 3, 1, 0).reshape(4 * c_in, c_out))
        w_fused = jnp.concatenate(parts, axis=0)[None]                # (1,16Ci,Co)
    else:
        c_out = weight.shape[1]
        out_rows, out_w = H, W                 # per output phase (polyphase)
        n_phase, halo = 4, 2
        xs = xp                                # (N, H+2, W+2, Cin)
        k_tap = c_in
        # Polyphase transposed conv: phase (ry,rx), tap (a,b) reads
        # xp[i+ry+a, j+rx+b] against weight[..,3-ry-2a,3-rx-2b]; the 4 taps of a
        # phase are fused into one matmul with K = 4*Cin.
        taps_by_phase = []
        w_ph = []
        for ry in range(2):
            for rx in range(2):
                taps = []
                parts = []
                for a in range(2):
                    for b in range(2):
                        taps.append((ry + a, rx + b))
                        parts.append(weight[:, :, 3 - ry - 2 * a, 3 - rx - 2 * b])
                taps_by_phase.append(taps)
                w_ph.append(jnp.concatenate(parts, axis=0))          # (4Ci, Co)
        w_fused = jnp.stack(w_ph, axis=0)                            # (4,4Ci,Co)

    k_fused = 4 * k_tap
    # Only Cout is padded to a lane multiple (MXU N dim); the input channel dim
    # and the raw / normalized outputs keep their real widths so HBM traffic
    # stays proportional to the real data.
    co_pad = _round_up(c_out, 128)
    w_fused = jnp.pad(w_fused, ((0, 0), (0, 0), (0, co_pad - c_out)))
    w_fused = w_fused.astype(jnp.bfloat16)

    # Pad the (sublane) width to a multiple of 8 so tap-window slices stay
    # aligned, and cast the band to the bf16 MXU operand dtype.
    wp_in = xs.shape[2]
    wp_pad = _round_up(wp_in, 8)
    xs = jnp.pad(xs, ((0, 0), (0, 0), (0, wp_pad - wp_in), (0, 0)))
    xs = xs.astype(jnp.bfloat16)

    vmem_limit, tile_budget = _vmem_limits()
    raw_dtype = jnp.bfloat16 if bn else jnp.float32
    if tile_rows is None:
        tile_rows = _pick_tile_rows(out_rows, out_w, wp_pad, k_tap, k_fused,
                                    n_phase, co_pad, c_out, halo,
                                    jnp.dtype(raw_dtype).itemsize, tile_budget)
    assert out_rows % tile_rows == 0 and tile_rows % halo == 0
    assert (tile_rows * out_w) % 8 == 0 or tile_rows == out_rows

    raw, stats_part = _conv_pass(
        xs, w_fused, taps_by_phase=taps_by_phase, relu=relu,
        tile_rows=tile_rows, out_rows=out_rows, out_w=out_w, halo=halo,
        c_out=c_out, raw_dtype=raw_dtype, vmem_limit=vmem_limit)

    p_total = out_rows * out_w
    if bn:
        # Reduce the per-row-tile partial sums (f32) into per-(image, channel)
        # mean / inv-std.  E[x^2]-mean^2 in f32 is adequate at these sizes;
        # switch to centered partial stats for very large feature maps.
        stats = jnp.sum(stats_part, axis=1)[:, :, :c_out]        # (N, 2, Cout)
        count = float(n_phase * p_total)
        mean = stats[:, 0, :] / count
        var = jnp.maximum(stats[:, 1, :] / count - mean * mean, 0.0)
        inv = jax.lax.rsqrt(var + eps)
        mi = jnp.stack([mean, inv], axis=1)                      # (N, 2, Cout) f32
        out = _norm_pass(raw.reshape(N, n_phase * p_total, c_out), mi,
                         tile_budget=tile_budget, vmem_limit=vmem_limit)
    else:
        out = raw.astype(jnp.float32)

    out = out.reshape(N, n_phase, p_total, c_out)
    if not upsample:
        out = out.reshape(N, out_rows, out_w, c_out)
        out = jnp.transpose(out, (0, 3, 1, 2))                   # NCHW
    else:
        out = out.reshape(N, 2, 2, out_rows, out_w, c_out)       # (N,ry,rx,i,j,C)
        out = jnp.transpose(out, (0, 5, 3, 1, 4, 2)).reshape(
            N, c_out, 2 * out_rows, 2 * out_w)

    if drop:
        # TODO(synk): Dropout2d(0.5) train-mode channel masking not implemented;
        # eval-mode dropout is the identity, which is what is returned here.
        pass
    return out


# ----------------------------- pure-JAX reference ----------------------------
def _reference(x, weight, *, upsample, relu, bn):
    y = jnp.maximum(x, 0.0) if relu else jnp.where(x >= 0.0, x, 0.2 * x)
    dn = jax.lax.conv_dimension_numbers(x.shape, (1, 1, 4, 4), ("NCHW", "OIHW", "NCHW"))
    if not upsample:
        y = jax.lax.conv_general_dilated(y, weight, (2, 2), [(1, 1), (1, 1)],
                                         dimension_numbers=dn)
    else:
        w_eq = jnp.flip(weight, axis=(2, 3)).transpose(1, 0, 2, 3)
        y = jax.lax.conv_general_dilated(y, w_eq, (1, 1), [(2, 2), (2, 2)],
                                         lhs_dilation=(2, 2), dimension_numbers=dn)
    if bn:
        mean = jnp.mean(y, axis=(2, 3), keepdims=True)
        var = jnp.mean((y - mean) ** 2, axis=(2, 3), keepdims=True)
        y = (y - mean) * jax.lax.rsqrt(var + 1e-5)
    return y


# ---------------------------------- main --------------------------------------
if __name__ == "__main__":
    key = jax.random.PRNGKey(0)
    kx, kw1, kw2 = jax.random.split(key, 3)

    N, Cin, Cout, H, W = 2, 4, 8, 16, 16
    x = jax.random.normal(kx, (N, Cin, H, W), dtype=jnp.float32)
    w_conv = jax.random.normal(kw1, (Cout, Cin, 4, 4), dtype=jnp.float32) * 0.1
    w_deconv = jax.random.normal(kw2, (Cin, Cout, 4, 4), dtype=jnp.float32) * 0.1

    # default config: leaky_relu -> Conv2d(4,2,1) -> InstanceNorm2d
    # (2 row tiles: exercises halo handling + partial-stats reduction)
    out_down = block_unet1_forward(x, w_conv, upsample=False, relu=False,
                                   drop=False, bn=True, tile_rows=4)
    jax.block_until_ready(out_down)
    ref_down = _reference(x, w_conv, upsample=False, relu=False, bn=True)
    np.testing.assert_allclose(np.asarray(out_down), np.asarray(ref_down),
                               atol=5e-2, rtol=5e-2)
    assert out_down.shape == (N, Cout, H // 2, W // 2)

    # upsample config: leaky_relu -> ConvTranspose2d(4,2,1) -> InstanceNorm2d
    out_up = block_unet1_forward(x, w_deconv, upsample=True, relu=False,
                                 drop=False, bn=True, tile_rows=8)
    jax.block_until_ready(out_up)
    ref_up = _reference(x, w_deconv, upsample=True, relu=False, bn=True)
    np.testing.assert_allclose(np.asarray(out_up), np.asarray(ref_up),
                               atol=5e-2, rtol=5e-2)
    assert out_up.shape == (N, Cout, 2 * H, 2 * W)

    # relu=True, bn=False variant, automatic (generation-aware) tile selection
    out_rb = block_unet1_forward(x, w_conv, upsample=False, relu=True,
                                 drop=False, bn=False)
    jax.block_until_ready(out_rb)
    ref_rb = _reference(x, w_conv, upsample=False, relu=True, bn=False)
    np.testing.assert_allclose(np.asarray(out_rb), np.asarray(ref_rb),
                               atol=5e-2, rtol=5e-2)

    print("KERNEL_OK")
</pallas_src>

<mosaic_0001>
module attributes {stable_mosaic.version = 11 : i64} {
  func.func @_conv_stats_kernel(%arg0: i32, %arg1: i32, %arg2: memref<1x4x16x16xbf16, #tpu.memory_space<vmem>>, %arg3: memref<1x1x16x16xbf16, #tpu.memory_space<vmem>>, %arg4: memref<1x64x128xbf16, #tpu.memory_space<vmem>>, %arg5: memref<1x1x32x8xbf16, #tpu.memory_space<vmem>>, %arg6: memref<1x1x2x128xf32, #tpu.memory_space<vmem>>, %arg7: memref<5x16x16xbf16, #tpu.memory_space<vmem>>, %arg8: memref<32x64xbf16, #tpu.memory_space<vmem>>) attributes {dimension_semantics = [#tpu.dimension_semantics<parallel>, #tpu.dimension_semantics<parallel>], iteration_bounds = array<i64: 2, 2>, scalar_prefetch = 0 : i64, scratch_operands = 2 : i64, tpu.core_type = #tpu.core_type<tc>, window_params = [{transform_indices = @transform_0, window_bounds = array<i64: 1, 4, 16, 16>}, {transform_indices = @transform_1, window_bounds = array<i64: 1, 1, 16, 16>}, {pipeline_mode = #tpu.pipeline_mode<synchronous>, transform_indices = @transform_2, window_bounds = array<i64: 1, 64, 128>}, {transform_indices = @transform_3, window_bounds = array<i64: 1, 1, 32, 8>}, {transform_indices = @transform_4, window_bounds = array<i64: 1, 1, 2, 128>}]} {
    %c0 = arith.constant 0 : index
    %c0_0 = arith.constant 0 : index
    %c0_1 = arith.constant 0 : index
    %c0_2 = arith.constant 0 : index
    %0 = vector.load %arg2[%c0, %c0_0, %c0_1, %c0_2] : memref<1x4x16x16xbf16, #tpu.memory_space<vmem>>, vector<1x4x16x16xbf16>
    %1 = vector.shape_cast %0 : vector<1x4x16x16xbf16> to vector<4x16x16xbf16>
    %cst = arith.constant 0.000000e+00 : bf16
    %2 = vector.broadcast %cst : bf16 to vector<4x16x16xbf16>
    %3 = arith.cmpf oge, %1, %2 : vector<4x16x16xbf16>
    %cst_3 = arith.constant 2.001950e-01 : bf16
    %4 = vector.broadcast %cst_3 : bf16 to vector<4x16x16xbf16>
    %5 = arith.mulf %1, %4 : vector<4x16x16xbf16>
    %6 = arith.select %3, %1, %5 : vector<4x16x16xi1>, vector<4x16x16xbf16>
    %c0_4 = arith.constant 0 : index
    %c0_5 = arith.constant 0 : index
    %c0_6 = arith.constant 0 : index
    %7 = vector.load %arg7[%c0_4, %c0_5, %c0_6] : memref<5x16x16xbf16, #tpu.memory_space<vmem>>, vector<4x16x16xbf16>
    tpu.vector_store %arg7[%c0_4, %c0_5, %c0_6], %6 {strides = array<i32>} : memref<5x16x16xbf16, #tpu.memory_space<vmem>>, vector<4x16x16xbf16>,
    %c0_7 = arith.constant 0 : index
    %c0_8 = arith.constant 0 : index
    %c0_9 = arith.constant 0 : index
    %c0_10 = arith.constant 0 : index
    %8 = vector.load %arg3[%c0_7, %c0_8, %c0_9, %c0_10] : memref<1x1x16x16xbf16, #tpu.memory_space<vmem>>, vector<1x1x16x16xbf16>
    %9 = vector.shape_cast %8 : vector<1x1x16x16xbf16> to vector<1x16x16xbf16>
    %cst_11 = arith.constant 0.000000e+00 : bf16
    %10 = vector.broadcast %cst_11 : bf16 to vector<1x16x16xbf16>
    %11 = arith.cmpf oge, %9, %10 : vector<1x16x16xbf16>
    %cst_12 = arith.constant 2.001950e-01 : bf16
    %12 = vector.broadcast %cst_12 : bf16 to vector<1x16x16xbf16>
    %13 = arith.mulf %9, %12 : vector<1x16x16xbf16>
    %14 = arith.select %11, %9, %13 : vector<1x16x16xi1>, vector<1x16x16xbf16>
    %c4 = arith.constant 4 : index
    %c0_13 = arith.constant 0 : index
    %c0_14 = arith.constant 0 : index
    %15 = vector.load %arg7[%c4, %c0_13, %c0_14] : memref<5x16x16xbf16, #tpu.memory_space<vmem>>, vector<1x16x16xbf16>
    tpu.vector_store %arg7[%c4, %c0_13, %c0_14], %14 {strides = array<i32>} : memref<5x16x16xbf16, #tpu.memory_space<vmem>>, vector<1x16x16xbf16>,
    %c0_15 = arith.constant 0 : index
    %c0_16 = arith.constant 0 : index
    %c0_17 = arith.constant 0 : index
    %16 = vector.load %arg7[%c0_15, %c0_16, %c0_17] : memref<5x16x16xbf16, #tpu.memory_space<vmem>>, vector<4x8x16xbf16>
    %17 = vector.shape_cast %16 : vector<4x8x16xbf16> to vector<32x16xbf16>
    %c0_18 = arith.constant 0 : index
    %c0_19 = arith.constant 0 : index
    %18 = vector.load %arg8[%c0_18, %c0_19] : memref<32x64xbf16, #tpu.memory_space<vmem>>, vector<32x16xbf16>
    tpu.vector_store %arg8[%c0_18, %c0_19], %17 {strides = array<i32>} : memref<32x64xbf16, #tpu.memory_space<vmem>>, vector<32x16xbf16>,
    %c0_20 = arith.constant 0 : index
    %c1 = arith.constant 1 : index
    %c0_21 = arith.constant 0 : index
    %19 = vector.load %arg7[%c0_20, %c1, %c0_21] : memref<5x16x16xbf16, #tpu.memory_space<vmem>>, vector<4x8x16xbf16>
    %20 = vector.shape_cast %19 : vector<4x8x16xbf16> to vector<32x16xbf16>
    %c0_22 = arith.constant 0 : index
    %c16 = arith.constant 16 : index
    %21 = vector.load %arg8[%c0_22, %c16] : memref<32x64xbf16, #tpu.memory_space<vmem>>, vector<32x16xbf16>
    tpu.vector_store %arg8[%c0_22, %c16], %20 {strides = array<i32>} : memref<32x64xbf16, #tpu.memory_space<vmem>>, vector<32x16xbf16>,
    %c1_23 = arith.constant 1 : index
    %c0_24 = arith.constant 0 : index
    %c0_25 = arith.constant 0 : index
    %22 = vector.load %arg7[%c1_23, %c0_24, %c0_25] : memref<5x16x16xbf16, #tpu.memory_space<vmem>>, vector<4x8x16xbf16>
    %23 = vector.shape_cast %22 : vector<4x8x16xbf16> to vector<32x16xbf16>
    %c0_26 = arith.constant 0 : index
    %c32 = arith.constant 32 : index
    %24 = vector.load %arg8[%c0_26, %c32] : memref<32x64xbf16, #tpu.memory_space<vmem>>, vector<32x16xbf16>
    tpu.vector_store %arg8[%c0_26, %c32], %23 {strides = array<i32>} : memref<32x64xbf16, #tpu.memory_space<vmem>>, vector<32x16xbf16>,
    %c1_27 = arith.constant 1 : index
    %c1_28 = arith.constant 1 : index
    %c0_29 = arith.constant 0 : index
    %25 = vector.load %arg7[%c1_27, %c1_28, %c0_29] : memref<5x16x16xbf16, #tpu.memory_space<vmem>>, vector<4x8x16xbf16>
    %26 = vector.shape_cast %25 : vector<4x8x16xbf16> to vector<32x16xbf16>
    %c0_30 = arith.constant 0 : index
    %c48 = arith.constant 48 : index
    %27 = vector.load %arg8[%c0_30, %c48] : memref<32x64xbf16, #tpu.memory_space<vmem>>, vector<32x16xbf16>
    tpu.vector_store %arg8[%c0_30, %c48], %26 {strides = array<i32>} : memref<32x64xbf16, #tpu.memory_space<vmem>>, vector<32x16xbf16>,
    %c0_31 = arith.constant 0 : index
    %c0_32 = arith.constant 0 : index
    %28 = vector.load %arg8[%c0_31, %c0_32] : memref<32x64xbf16, #tpu.memory_space<vmem>>, vector<32x64xbf16>
    %c0_33 = arith.constant 0 : index
    %c0_34 = arith.constant 0 : index
    %c0_35 = arith.constant 0 : index
    %29 = vector.load %arg4[%c0_33, %c0_34, %c0_35] : memref<1x64x128xbf16, #tpu.memory_space<vmem>>, vector<1x64x128xbf16>
    %30 = vector.shape_cast %29 : vector<1x64x128xbf16> to vector<64x128xbf16>
    %cst_36 = arith.constant dense<0.000000e+00> : vector<32x128xf32>
    %31 = tpu.matmul %28, %30, %cst_36 {dimension_numbers = #tpu.dot_dimension_numbers<[1], [0], [0], [1], [0, 0, 1, 1], [], []>} : vector<32x64xbf16>, vector<64x128xbf16>, vector<32x128xf32> -> vector<32x128xf32>
    %32 = vector.extract_strided_slice %31 {offsets = [0, 0], sizes = [32, 8], strides = [1, 1]} : vector<32x128xf32> to vector<32x8xf32>
    %33 = arith.truncf %32 : vector<32x8xf32> to vector<32x8xbf16>
    %c0_37 = arith.constant 0 : index
    %c0_38 = arith.constant 0 : index
    %c0_39 = arith.constant 0 : index
    %c0_40 = arith.constant 0 : index
    %34 = vector.load %arg5[%c0_37, %c0_38, %c0_39, %c0_40] : memref<1x1x32x8xbf16, #tpu.memory_space<vmem>>, vector<1x1x32x8xbf16>
    %35 = vector.shape_cast %34 : vector<1x1x32x8xbf16> to vector<32x8xbf16>
    %36 = vector.shape_cast %33 : vector<32x8xbf16> to vector<1x1x32x8xbf16>
    tpu.vector_store %arg5[%c0_37, %c0_38, %c0_39, %c0_40], %36 {strides = array<i32>} : memref<1x1x32x8xbf16, #tpu.memory_space<vmem>>, vector<1x1x32x8xbf16>,
    %cst_41 = arith.constant dense<0.000000e+00> : vector<128xf32>
    %37 = vector.multi_reduction <add>, %31, %cst_41 [0] : vector<32x128xf32> to vector<128xf32>
    %38 = vector.shape_cast %37 : vector<128xf32> to vector<1x128xf32>
    %39 = arith.mulf %31, %31 : vector<32x128xf32>
    %cst_42 = arith.constant dense<0.000000e+00> : vector<128xf32>
    %40 = vector.multi_reduction <add>, %39, %cst_42 [0] : vector<32x128xf32> to vector<128xf32>
    %41 = vector.shape_cast %40 : vector<128xf32> to vector<1x128xf32>
    %c0_43 = arith.constant 0 : index
    %c0_44 = arith.constant 0 : index
    %c0_45 = arith.constant 0 : index
    %c0_46 = arith.constant 0 : index
    %42 = vector.load %arg6[%c0_43, %c0_44, %c0_45, %c0_46] : memref<1x1x2x128xf32, #tpu.memory_space<vmem>>, vector<1x1x1x128xf32>
    %43 = vector.shape_cast %42 : vector<1x1x1x128xf32> to vector<1x128xf32>
    %44 = vector.shape_cast %38 : vector<1x128xf32> to vector<1x1x1x128xf32>
    tpu.vector_store %arg6[%c0_43, %c0_44, %c0_45, %c0_46], %44 {strides = array<i32>} : memref<1x1x2x128xf32, #tpu.memory_space<vmem>>, vector<1x1x1x128xf32>,
    %c0_47 = arith.constant 0 : index
    %c0_48 = arith.constant 0 : index
    %c1_49 = arith.constant 1 : index
    %c0_50 = arith.constant 0 : index
    %45 = vector.load %arg6[%c0_47, %c0_48, %c1_49, %c0_50] : memref<1x1x2x128xf32, #tpu.memory_space<vmem>>, vector<1x1x1x128xf32>
    %46 = vector.shape_cast %45 : vector<1x1x1x128xf32> to vector<1x128xf32>
    %47 = vector.shape_cast %41 : vector<1x128xf32> to vector<1x1x1x128xf32>
    tpu.vector_store %arg6[%c0_47, %c0_48, %c1_49, %c0_50], %47 {strides = array<i32>} : memref<1x1x2x128xf32, #tpu.memory_space<vmem>>, vector<1x1x1x128xf32>,
    return
  }
  func.func @transform_0(%arg0: i32, %arg1: i32) -> (i32, i32, i32, i32) {
    %c0_i32 = arith.constant 0 : i32
    %c0_i32_0 = arith.constant 0 : i32
    %c0_i32_1 = arith.constant 0 : i32
    return %arg0, %arg1, %c0_i32, %c0_i32_0 : i32, i32, i32, i32
  }
  func.func @transform_1(%arg0: i32, %arg1: i32) -> (i32, i32, i32, i32) {
    %c1_i32 = arith.constant 1 : i32
    %0 = arith.addi %arg1, %c1_i32 : i32
    %c4_i32 = arith.constant 4 : i32
    %1 = arith.muli %0, %c4_i32 : i32
    %c0_i32 = arith.constant 0 : i32
    %c0_i32_0 = arith.constant 0 : i32
    %c0_i32_1 = arith.constant 0 : i32
    return %arg0, %1, %c0_i32, %c0_i32_0 : i32, i32, i32, i32
  }
  func.func @transform_2(%arg0: i32, %arg1: i32) -> (i32, i32, i32) {
    %c0_i32 = arith.constant 0 : i32
    %c0_i32_0 = arith.constant 0 : i32
    %c0_i32_1 = arith.constant 0 : i32
    %c0_i32_2 = arith.constant 0 : i32
    return %c0_i32, %c0_i32_0, %c0_i32_1 : i32, i32, i32
  }
  func.func @transform_3(%arg0: i32, %arg1: i32) -> (i32, i32, i32, i32) {
    %c0_i32 = arith.constant 0 : i32
    %c0_i32_0 = arith.constant 0 : i32
    %c0_i32_1 = arith.constant 0 : i32
    return %arg0, %c0_i32, %arg1, %c0_i32_0 : i32, i32, i32, i32
  }
  func.func @transform_4(%arg0: i32, %arg1: i32) -> (i32, i32, i32, i32) {
    %c0_i32 = arith.constant 0 : i32
    %c0_i32_0 = arith.constant 0 : i32
    %c0_i32_1 = arith.constant 0 : i32
    return %arg0, %arg1, %c0_i32, %c0_i32_0 : i32, i32, i32, i32
  }
}

</mosaic_0001>

<llo_original>
// kernel: tpu_custom_call.1
$region0: #{tpu_custom_call.1}
  #allocation0 [shape = 'u32[]', space=smem, size = 0x4, offset = 0x4, fixed_abs, tag = 'smem constant byte address 0x4 - core index']
  #allocation1 [shape = 'u32[144,128]{1,0:T(1,128)}', space=vmem, size = 0x12000, scoped, tag = 'internal scratch']
  #allocation2 [shape = 'bf16[5,16,16]{2,1,0:T(16,128)(2,1)}', space=vmem, size = 0x5000, scoped, tag = 'scratch operand']
  #allocation3 [shape = 'bf16[32,64]{1,0:T(16,128)(2,1)}', space=vmem, size = 0x2000, scoped, tag = 'scratch operand']
  %s0 = inlined_call_operand.hbm [shape: bf16[2,9,16,16], index: 0, kind: input, shape index: {}]
  %s1 = inlined_call_operand.hbm [shape: bf16[2,9,16,16], index: 1, kind: input, shape index: {}]
  %s2 = inlined_call_operand.hbm [shape: bf16[1,64,128], index: 2, kind: input, shape index: {}]
  %s3 = inlined_call_operand.vmem [shape: bf16[2,1,64,8], index: 3, kind: output, shape index: {0}]
  %s4 = inlined_call_operand.hbm [shape: f32[2,2,2,128], index: 4, kind: output, shape index: {1}]
  %5 = xla_tuple %s3, %s4
  %s6 = sld [smem:[#allocation0]]
  $region65: #{tpu_custom_call.1} parent=0
    _
  %s8 = ssub.s32 1, %s6
  %s9 = scalar_select 0, %s8, %s6
  $region1: #{tpu_custom_call.1} parent=0
    #allocation4 [shape = 'u8[32768]{0}', space=vmem, size = 0x8000, scoped, tag = 'input window, operand 0']
    #allocation5 [shape = 's32[2]{0}', space=sflag, size = 0x8, scoped, tag = 'scoped memory for tpu_custom_call.1']
    #allocation6 [shape = 's32[2]{0}', space=sflag, size = 0x8, scoped, tag = 'scoped memory for tpu_custom_call.1']
    #allocation7 [shape = 'u8[8192]{0}', space=vmem, size = 0x2000, scoped, tag = 'input window, operand 1']
    #allocation8 [shape = 's32[2]{0}', space=sflag, size = 0x8, scoped, tag = 'scoped memory for tpu_custom_call.1']
    #allocation9 [shape = 'u8[16384]{0}', space=vmem, size = 0x4000, scoped, tag = 'input window, operand 2, single buffered']
    #allocation10 [shape = 'u8[2048]{0}', space=vmem, size = 0x800, scoped, tag = 'output window, operand 1']
    %10 = vsyncpa [#allocation5], 0
    %s11 = scalar_lea.sflag [#allocation5], 1
    %12 = vsyncpa %s11, 0
    %13 = vsyncpa [#allocation8], 0
    %s14 = scalar_lea.sflag [#allocation8], 1
    %15 = vsyncpa %s14, 0
    %16 = vsyncpa [#allocation6], 0
    %s17 = scalar_lea.sflag [#allocation6], 1
    %18 = vsyncpa %s17, 0
    loop: start=0, step=1, limit=6
    $region2: #{tpu_custom_call.1} parent=1 // loop_pre_header
      _
    $region3: #{tpu_custom_call.1} parent=1 // loop_header
      %s20 = sphi 0, %s24
      %p21 = scmp.ge.s32.totalorder %s20, 6
      %s27 = sphi 0, %s39
      %s28 = sphi 0, %s35
      %s29 = sphi 0, %s27
      %s30 = sphi 0, %s28
      %s31 = sphi 0, %s29
      %s32 = sphi 0, %s30
      %s44 = sphi 0, %s46
      %s47 = sphi 0, %s44
      %s48 = sphi 0, %s47
      %s64 = sphi 0, %s48
      %s76 = sphi 0, %s78
      %s79 = sphi 0, %s76
      %s80 = sphi 0, %s79
      %s96 = sphi 0, %s80
      %s100 = sphi 0, %s100
      %s102 = sphi 0, %s100
      %s103 = sphi 0, %s102
      %s117 = sphi 0, %s103
      %s125 = sphi 0, %s127
      %s128 = sphi 0, %s125
      %s129 = sphi 0, %s128
      %s145 = sphi 0, %s129
      %s153 = sphi 0, %s155
      %s156 = sphi 0, %s153
      %s157 = sphi 0, %s156
      %s173 = sphi 0, %s157
    $region4: #{tpu_custom_call.1} parent=1 // loop_header_branch
      %23 = sbr.rel (%p21) target = $region8
    $region5: #{tpu_custom_call.1} parent=1 // loop_body
      %s25 = ssub.s32 %s20, 1
      %s26 = ssub.s32 %s20, 2
      %s33 = sadd.s32 1, %s28
      %p34 = scmp.ge.s32.totalorder %s33, 2
      %s35 = scalar_select %p34, 0, %s33
      %s36 = sadd.s32 1, %s27
      %s37 = scalar_select %p34, %s36, %s27
      %p38 = scmp.ge.s32.totalorder %s37, 2
      %s39 = scalar_select %p38, 0, %s37
      %s40 = ssub.s32 %s27, %s39
      %s41 = ssub.s32 %s28, %s35
      %s42 = sor.u32 %s40, %s41
      %p43 = scmp.eq.s32.totalorder %s42, 0
      %s45 = sadd.s32 %s44, 1
      %s46 = scalar_select %p43, %s44, %s45
      %p49 = pneg %p43
      %p50 = scmp.eq.s32.totalorder %s20, 3
      %p51 = por %p49, %p50
      %p52 = scmp.ne.s32.totalorder %s44, %s47
      %p53 = scmp.eq.s32.totalorder %s20, 0
      %p54 = por %p52, %p53
      %p55 = scmp.ne.s32.totalorder %s44, %s47
      %p56 = scmp.eq.s32.totalorder %s25, 3
      %p57 = por %p55, %p56
      %p58 = scmp.ne.s32.totalorder %s47, %s48
      %p59 = scmp.eq.s32.totalorder %s25, 0
      %p60 = por %p58, %p59
      %p61 = scmp.ne.s32.totalorder %s47, %s48
      %p62 = scmp.eq.s32.totalorder %s26, 3
      %p63 = por %p61, %p62
      %p65 = scmp.ne.s32.totalorder %s48, %s64
      %p66 = scmp.eq.s32.totalorder %s26, 0
      %p67 = por %p65, %p66
      %s68 = sadd.s32 %s28, 1
      %s69 = smul.u32 %s68, 4
      %s70 = sadd.s32 %s35, 1
      %s71 = smul.u32 %s70, 4
      %s72 = ssub.s32 %s27, %s39
      %s73 = ssub.s32 %s69, %s71
      %s74 = sor.u32 %s72, %s73
      %p75 = scmp.eq.s32.totalorder %s74, 0
      %s77 = sadd.s32 %s76, 1
      %s78 = scalar_select %p75, %s76, %s77
      %p81 = pneg %p75
      %p82 = scmp.eq.s32.totalorder %s20, 3
      %p83 = por %p81, %p82
      %p84 = scmp.ne.s32.totalorder %s76, %s79
      %p85 = scmp.eq.s32.totalorder %s20, 0
      %p86 = por %p84, %p85
      %p87 = scmp.ne.s32.totalorder %s76, %s79
      %p88 = scmp.eq.s32.totalorder %s25, 3
      %p89 = por %p87, %p88
      %p90 = scmp.ne.s32.totalorder %s79, %s80
      %p91 = scmp.eq.s32.totalorder %s25, 0
      %p92 = por %p90, %p91
      %p93 = scmp.ne.s32.totalorder %s79, %s80
      %p94 = scmp.eq.s32.totalorder %s26, 3
      %p95 = por %p93, %p94
      %p97 = scmp.ne.s32.totalorder %s80, %s96
      %p98 = scmp.eq.s32.totalorder %s26, 0
      %p99 = por %p97, %p98
      %s101 = sadd.s32 %s100, 1
      %p104 = scmp.eq.s32.totalorder %s20, 3
      %p105 = scmp.ne.s32.totalorder %s100, %s102
      %p106 = scmp.eq.s32.totalorder %s20, 0
      %p107 = por %p105, %p106
      %p108 = scmp.ne.s32.totalorder %s100, %s102
      %p109 = scmp.eq.s32.totalorder %s25, 3
      %p110 = por %p108, %p109
      %p111 = scmp.ne.s32.totalorder %s102, %s103
      %p112 = scmp.eq.s32.totalorder %s25, 0
      %p113 = por %p111, %p112
      %p114 = scmp.ne.s32.totalorder %s102, %s103
      %p115 = scmp.eq.s32.totalorder %s26, 3
      %p116 = por %p114, %p115
      %p118 = scmp.ne.s32.totalorder %s103, %s117
      %p119 = scmp.eq.s32.totalorder %s26, 0
      %p120 = por %p118, %p119
      %s121 = ssub.s32 %s27, %s39
      %s122 = ssub.s32 %s28, %s35
      %s123 = sor.u32 %s121, %s122
      %p124 = scmp.eq.s32.totalorder %s123, 0
      %s126 = sadd.s32 %s125, 1
      %s127 = scalar_select %p124, %s125, %s126
      %p130 = pneg %p124
      %p131 = scmp.eq.s32.totalorder %s20, 3
      %p132 = por %p130, %p131
      %p133 = scmp.ne.s32.totalorder %s125, %s128
      %p134 = scmp.eq.s32.totalorder %s20, 0
      %p135 = por %p133, %p134
      %p136 = scmp.ne.s32.totalorder %s125, %s128
      %p137 = scmp.eq.s32.totalorder %s25, 3
      %p138 = por %p136, %p137
      %p139 = scmp.ne.s32.totalorder %s128, %s129
      %p140 = scmp.eq.s32.totalorder %s25, 0
      %p141 = por %p139, %p140
      %p142 = scmp.ne.s32.totalorder %s128, %s129
      %p143 = scmp.eq.s32.totalorder %s26, 3
      %p144 = por %p142, %p143
      %p146 = scmp.ne.s32.totalorder %s129, %s145
      %p147 = scmp.eq.s32.totalorder %s26, 0
      %p148 = por %p146, %p147
      %s149 = ssub.s32 %s27, %s39
      %s150 = ssub.s32 %s28, %s35
      %s151 = sor.u32 %s149, %s150
      %p152 = scmp.eq.s32.totalorder %s151, 0
      %s154 = sadd.s32 %s153, 1
      %s155 = scalar_select %p152, %s153, %s154
      %p158 = pneg %p152
      %p159 = scmp.eq.s32.totalorder %s20, 3
      %p160 = por %p158, %p159
      %p161 = scmp.ne.s32.totalorder %s153, %s156
      %p162 = scmp.eq.s32.totalorder %s20, 0
      %p163 = por %p161, %p162
      %p164 = scmp.ne.s32.totalorder %s153, %s156
      %p165 = scmp.eq.s32.totalorder %s25, 3
      %p166 = por %p164, %p165
      %p167 = scmp.ne.s32.totalorder %s156, %s157
      %p168 = scmp.eq.s32.totalorder %s25, 0
      %p169 = por %p167, %p168
      %p170 = scmp.ne.s32.totalorder %s156, %s157
      %p171 = scmp.eq.s32.totalorder %s26, 3
      %p172 = por %p170, %p171
      %p174 = scmp.ne.s32.totalorder %s157, %s173
      %p175 = scmp.eq.s32.totalorder %s26, 0
      %p176 = por %p174, %p175
      %p177 = scmp.le.s32.totalorder 1, %s20
      %p178 = scmp.lt.s32.totalorder %s20, 5
      %p179 = pnand %p177, %p178
      %p180 = pneg %p179
      // Predicated region
      $region9: #{tpu_custom_call.1} parent=5 // pred_check
        _
      $region10: #{tpu_custom_call.1} parent=5 // pred_check_branch
        %182 = sbr.rel (%p179) target = $region12
      $region11: #{tpu_custom_call.1} parent=5 // pred_region
        %s183 = ssub.s32 %s20, 1
        // Predicated region
        $region13: #{tpu_custom_call.1} parent=11 // pred_check
          %p184 = pneg %p113
        $region14: #{tpu_custom_call.1} parent=11 // pred_check_branch
          %186 = sbr.rel (%p184) target = $region16
        $region15: #{tpu_custom_call.1} parent=11 // pred_region
          %s188 = ssub.s32 512, 512
          %189 = vsyncadd [#allocation8], %s188
          %s190 = sshll.u32 [#allocation9], 4
          %s191 = int_to_ptr.vmem [resolvable:$true] %s190
          %196 = dma.hbm_to_vmem [thread:$0]  %s2, 512, %s191, [#allocation8], 64, 64, 4
        $region16: #{tpu_custom_call.1} parent=11 // pred_fallthru
          _
      $region12: #{tpu_custom_call.1} parent=5 // pred_fallthru
        _
      %p197 = scmp.lt.s32.totalorder %s20, 4
      // Predicated region
      $region17: #{tpu_custom_call.1} parent=5 // pred_check
        %p198 = pneg %p197
      $region18: #{tpu_custom_call.1} parent=5 // pred_check_branch
        %200 = sbr.rel (%p198) target = $region20
      $region19: #{tpu_custom_call.1} parent=5 // pred_region
        // Predicated region
        $region21: #{tpu_custom_call.1} parent=19 // pred_check
          %p201 = pneg %p54
        $region22: #{tpu_custom_call.1} parent=19 // pred_check_branch
          %203 = sbr.rel (%p201) target = $region24
        $region23: #{tpu_custom_call.1} parent=19 // pred_region
          %s204 = sand.u32 %s44, 1
          %s205 = scalar_lea.sflag [#allocation5], %s204
          %s206 = sand.u32 %s44, 1
          %s207 = smul.addr %s206, 32
          %s208 = scalar_lea.vmem [#allocation4], %s207
          %s209 = smul.u32 4, %s28
          %s210 = ssub.s32 9, %s209
          %p211 = scmp.lt.s32.totalorder %s210, 4
          %s212 = scalar_select %p211, %s210, 4
          %s213 = smul.u32 64, %s212
          %s214 = smul.u32 %s213, 2
          %s216 = ssub.s32 512, %s214
          %217 = vsyncadd %s205, %s216
          %p218 = scmp.ne.s32.totalorder 0, %s214
          %s219 = smul.addr %s209, 2
          %s220 = smul.addr %s27, 18
          %s221 = sadd.s32 %s219, %s220
          %s222 = smul.addr %s221, 64
          %s223 = scalar_lea.hbm %s0, %s222
          %s224 = smul.u32 %s212, 2
          %s225 = smul.u32 4, %s224
          %s226 = sshll.u32 %s208, 4
          %s227 = int_to_ptr.vmem [resolvable:$true] %s226
          %s228 = sshll.u32 %s225, 4
          %232 = dma.hbm_to_vmem [thread:$0]  (%p218), %s223, %s228, %s227, %s205, 64, 64, 4
        $region24: #{tpu_custom_call.1} parent=19 // pred_fallthru
          _
        // Predicated region
        $region25: #{tpu_custom_call.1} parent=19 // pred_check
          %p233 = pneg %p86
        $region26: #{tpu_custom_call.1} parent=19 // pred_check_branch
          %235 = sbr.rel (%p233) target = $region28
        $region27: #{tpu_custom_call.1} parent=19 // pred_region
          %s236 = sand.u32 %s20, 1
          %s237 = scalar_lea.sflag [#allocation8], %s236
          %s238 = sand.u32 %s76, 1
          %s239 = smul.addr %s238, 8
          %s240 = scalar_lea.vmem [#allocation7], %s239
          %s241 = sadd.s32 %s28, 1
          %s242 = smul.u32 %s241, 4
          %s244 = ssub.s32 128, 128
          %245 = vsyncadd %s237, %s244
          %s246 = smul.addr %s242, 2
          %s247 = smul.addr %s27, 18
          %s248 = sadd.s32 %s246, %s247
          %s249 = smul.addr %s248, 64
          %s250 = scalar_lea.hbm %s1, %s249
          %s251 = sshll.u32 %s240, 4
          %s252 = int_to_ptr.vmem [resolvable:$true] %s251
          %257 = dma.hbm_to_vmem [thread:$0]  %s250, 128, %s252, %s237, 64, 64, 4
        $region28: #{tpu_custom_call.1} parent=19 // pred_fallthru
          _
      $region20: #{tpu_custom_call.1} parent=5 // pred_fallthru
        _
      %p258 = scmp.le.s32.totalorder 1, %s20
      %p259 = scmp.lt.s32.totalorder %s20, 5
      %p260 = pnand %p258, %p259
      %p261 = pneg %p260
      // Predicated region
      $region29: #{tpu_custom_call.1} parent=5 // pred_check
        _
      $region30: #{tpu_custom_call.1} parent=5 // pred_check_branch
        %263 = sbr.rel (%p260) target = $region32
      $region31: #{tpu_custom_call.1} parent=5 // pred_region
        %s264 = ssub.s32 %s20, 1
        %s265 = sand.u32 %s47, 1
        %s266 = scalar_lea.sflag [#allocation5], %s265
        %s267 = sand.u32 %s47, 1
        %s268 = smul.addr %s267, 32
        %s269 = scalar_lea.vmem [#allocation4], %s268
        // Predicated region
        $region33: #{tpu_custom_call.1} parent=31 // pred_check
          %p270 = pneg %p60
        $region34: #{tpu_custom_call.1} parent=31 // pred_check_branch
          %272 = sbr.rel (%p270) target = $region36
        $region35: #{tpu_custom_call.1} parent=31 // pred_region
          %273 = dma.done %s266, 512
        $region36: #{tpu_custom_call.1} parent=31 // pred_fallthru
          _
        %s274 = sand.u32 %s25, 1
        %s275 = scalar_lea.sflag [#allocation8], %s274
        %s276 = sand.u32 %s79, 1
        %s277 = smul.addr %s276, 8
        %s278 = scalar_lea.vmem [#allocation7], %s277
        // Predicated region
        $region37: #{tpu_custom_call.1} parent=31 // pred_check
          %p279 = pneg %p92
        $region38: #{tpu_custom_call.1} parent=31 // pred_check_branch
          %281 = sbr.rel (%p279) target = $region40
        $region39: #{tpu_custom_call.1} parent=31 // pred_region
          %282 = dma.done %s275, 128
        $region40: #{tpu_custom_call.1} parent=31 // pred_fallthru
          _
        // Predicated region
        $region41: #{tpu_custom_call.1} parent=31 // pred_check
          %p283 = pneg %p113
        $region42: #{tpu_custom_call.1} parent=31 // pred_check_branch
          %285 = sbr.rel (%p283) target = $region44
        $region43: #{tpu_custom_call.1} parent=31 // pred_region
          %286 = dma.done [#allocation8], 512
        $region44: #{tpu_custom_call.1} parent=31 // pred_fallthru
          _
        %s287 = sand.u32 %s47, 1
        %s288 = scalar_lea.sflag [#allocation5], %s287
        %s289 = sand.u32 %s47, 1
        %s290 = smul.addr %s289, 32
        %s291 = scalar_lea.vmem [#allocation4], %s290
        %p292 = pneg %p60
        %p293 = pneg %p57
        %s294 = sand.u32 %s25, 1
        %s295 = scalar_lea.sflag [#allocation8], %s294
        %s296 = sand.u32 %s79, 1
        %s297 = smul.addr %s296, 8
        %s298 = scalar_lea.vmem [#allocation7], %s297
        %p299 = pneg %p92
        %p300 = pneg %p89
        %p301 = pneg %p113
        %p302 = pneg %p110
        %p303 = pneg %p141
        %p304 = pneg %p138
        %s305 = smul.u32 4, %s30
        %p306 = scmp.lt.s32.totalorder %s29, 1
        %s307 = scalar_select %p306, %s29, 1
        %p308 = scmp.lt.s32.totalorder %s305, 7
        %s309 = scalar_select %p308, %s305, 7
        %s310 = smul.addr %s307, 8
        %s311 = sadd.s32 %s309, %s310
        %s312 = smul.addr %s311, 4
        %s313 = scalar_lea.vmem %s3, %s312
        %p314 = pneg %p169
        %p315 = pneg %p166
        %s316 = sand.u32 %s156, 1
        %s317 = scalar_lea.sflag [#allocation6], %s316
        %s318 = sand.u32 %s156, 1
        %s319 = smul.addr %s318, 2
        %s320 = scalar_lea.vmem [#allocation10], %s319
        %s321 = smul.u32 4, %s30
        %s322 = ssub.s32 9, %s321
        %p323 = scmp.lt.s32.totalorder %s322, 4
        %s324 = scalar_select %p323, %s322, 4
        %s325 = smul.u32 64, %s324
        %s326 = smul.u32 %s325, 2
        %s327 = sadd.s32 %s30, 1
        %s328 = smul.u32 %s327, 4
        %s329 = smul.u32 4, %s30
        %p330 = scmp.lt.s32.totalorder %s29, 1
        %s331 = scalar_select %p330, %s29, 1
        %p332 = scmp.lt.s32.totalorder %s329, 7
        %s333 = scalar_select %p332, %s329, 7
        %s334 = smul.addr %s331, 8
        %s335 = sadd.s32 %s333, %s334
        %s336 = smul.addr %s335, 4
        %s337 = scalar_lea.vmem %s3, %s336
        %s338 = smul.u32 4, %s30
        %v341 = vld [vmem:[%s269] sm:$0xf]
        %v342 = vld [vmem:[%s269 + $0x4] sm:$0xf]
        %v343 = vld [vmem:[%s269 + $0x8] sm:$0xf]
        %v344 = vld [vmem:[%s269 + $0xc] sm:$0xf]
        %v345 = vld [vmem:[%s269 + $0x10] sm:$0xf]
        %v346 = vld [vmem:[%s269 + $0x14] sm:$0xf]
        %v347 = vld [vmem:[%s269 + $0x18] sm:$0xf]
        %v348 = vld [vmem:[%s269 + $0x1c] sm:$0xf]
        %vm349 = vcmp.ge.bf16.partialorder %v341, 0
        %vm350 = vcmp.ge.bf16.partialorder %v342, 0
        %vm351 = vcmp.ge.bf16.partialorder %v343, 0
        %vm352 = vcmp.ge.bf16.partialorder %v344, 0
        %vm353 = vcmp.ge.bf16.partialorder %v345, 0
        %vm354 = vcmp.ge.bf16.partialorder %v346, 0
        %vm355 = vcmp.ge.bf16.partialorder %v347, 0
        %vm356 = vcmp.ge.bf16.partialorder %v348, 0
        %v357 = vmul.bf16 %v341, 1045249613
        %v358 = vmul.bf16 %v342, 1045249613
        %v359 = vmul.bf16 %v343, 1045249613
        %v360 = vmul.bf16 %v344, 1045249613
        %v361 = vmul.bf16 %v345, 1045249613
        %v362 = vmul.bf16 %v346, 1045249613
        %v363 = vmul.bf16 %v347, 1045249613
        %v364 = vmul.bf16 %v348, 1045249613
        %v365 = vsel %vm349, %v341, %v357
        %v366 = vsel %vm350, %v342, %v358
        %v367 = vsel %vm351, %v343, %v359
        %v368 = vsel %vm352, %v344, %v360
        %v369 = vsel %vm353, %v345, %v361
        %v370 = vsel %vm354, %v346, %v362
        %v371 = vsel %vm355, %v347, %v363
        %v372 = vsel %vm356, %v348, %v364
        %v381 = vunpack.c.l.b16 %v365
        %v382 = vunpack.c.l.b16 %v366
        %v383 = vunpack.c.l.b16 %v367
        %v384 = vunpack.c.l.b16 %v368
        %v385 = vunpack.c.l.b16 %v369
        %v386 = vunpack.c.l.b16 %v370
        %v387 = vunpack.c.l.b16 %v371
        %v388 = vunpack.c.l.b16 %v372
        %v389 = vpack.c.b16 %v382, %v381
        %v390 = vpack.c.b16 %v384, %v383
        %v391 = vpack.c.b16 %v386, %v385
        %v392 = vpack.c.b16 %v388, %v387
        %vm397 = vcmask 130048
        %398 = vst.msk [vmem:[#allocation2] sm:$0xff] %vm397, %v389
        %399 = vst.msk [vmem:[#allocation2 + $0x8] sm:$0xff] %vm397, %v390
        %400 = vst.msk [vmem:[#allocation2 + $0x10] sm:$0xff] %vm397, %v391
        %401 = vst.msk [vmem:[#allocation2 + $0x18] sm:$0xff] %vm397, %v392
        %v402 = vld [vmem:[%s278] sm:$0xf]
        %v403 = vld [vmem:[%s278 + $0x4] sm:$0xf]
        %vm404 = vcmp.ge.bf16.partialorder %v402, 0
        %vm405 = vcmp.ge.bf16.partialorder %v403, 0
        %v406 = vmul.bf16 %v402, 1045249613
        %v407 = vmul.bf16 %v403, 1045249613
        %v408 = vsel %vm404, %v402, %v406
        %v409 = vsel %vm405, %v403, %v407
        %v412 = vunpack.c.l.b16 %v408
        %v413 = vunpack.c.l.b16 %v409
        %v414 = vpack.c.b16 %v413, %v412
        %s416 = scalar_lea.vmem [#allocation2], 32
        %417 = vst.msk [vmem:[%s416] sm:$0xff] %vm397, %v414
        %v418 = vld [vmem:[#allocation2] sm:$0xf]
        %v419 = vld [vmem:[#allocation2 + $0x8] sm:$0xf]
        %v420 = vld [vmem:[#allocation2 + $0x10] sm:$0xf]
        %v421 = vld [vmem:[#allocation2 + $0x18] sm:$0xf]
        %v426 = vunpack.c.l.b16 %v418
        %v427 = vunpack.c.l.b16 %v419
        %v428 = vunpack.c.l.b16 %v420
        %v429 = vunpack.c.l.b16 %v421
        %v430 = vpack.c.b16 %v427, %v426
        %v431 = vpack.c.b16 %v429, %v428
        %434 = vst.msk [vmem:[#allocation3] sm:$0xff] %vm397, %v430
        %435 = vst.msk [vmem:[#allocation3 + $0x8] sm:$0xff] %vm397, %v431
        %v436 = vld [vmem:[#allocation2] sm:$0x1f]
        %v437 = vld [vmem:[#allocation2 + $0x8] sm:$0x1f]
        %v438 = vld [vmem:[#allocation2 + $0x10] sm:$0x1f]
        %v439 = vld [vmem:[#allocation2 + $0x18] sm:$0x1f]
        %v444 = vunpack.c.l.b16 %v436
        %v445 = vunpack.c.h.b16 %v436
        %v446 = vunpack.c.l.b16 %v437
        %v447 = vunpack.c.h.b16 %v437
        %v448 = vunpack.c.l.b16 %v438
        %v449 = vunpack.c.h.b16 %v438
        %v450 = vunpack.c.l.b16 %v439
        %v451 = vunpack.c.h.b16 %v439
        %v452 = vpack.c.b16 %v444, %v444
        %v453 = vpack.c.b16 %v445, %v445
        %v454 = vpack.c.b16 %v446, %v446
        %v455 = vpack.c.b16 %v447, %v447
        %v456 = vpack.c.b16 %v448, %v448
        %v457 = vpack.c.b16 %v449, %v449
        %v458 = vpack.c.b16 %v450, %v450
        %v459 = vpack.c.b16 %v451, %v451
        %vm460 = vsmask.f32 3328
        %vm461 = vsmask.f32 7440
        %vm462 = vmor %vm460, %vm461
        %v464 = vshrl.u32 %v452, 16
        %v466 = vrot.slane %v464, 4
        %v467 = vshll.u32 %v452, 16
        %v469 = vrot.slane %v467, 5
        %v470 = vor.u32 %v466, %v469
        %v471 = vrot.slane %v470, 4
        %v473 = vshll.u32 %v453, 16
        %v475 = vrot.slane %v473, 5
        %v476 = vsel %vm462, %v471, %v475
        %v478 = vshrl.u32 %v454, 16
        %v480 = vrot.slane %v478, 4
        %v481 = vshll.u32 %v454, 16
        %v483 = vrot.slane %v481, 5
        %v484 = vor.u32 %v480, %v483
        %v485 = vrot.slane %v484, 4
        %v487 = vshll.u32 %v455, 16
        %v489 = vrot.slane %v487, 5
        %v490 = vsel %vm462, %v485, %v489
        %v492 = vshrl.u32 %v456, 16
        %v494 = vrot.slane %v492, 4
        %v495 = vshll.u32 %v456, 16
        %v497 = vrot.slane %v495, 5
        %v498 = vor.u32 %v494, %v497
        %v499 = vrot.slane %v498, 4
        %v501 = vshll.u32 %v457, 16
        %v503 = vrot.slane %v501, 5
        %v504 = vsel %vm462, %v499, %v503
        %v506 = vshrl.u32 %v458, 16
        %v508 = vrot.slane %v506, 4
        %v509 = vshll.u32 %v458, 16
        %v511 = vrot.slane %v509, 5
        %v512 = vor.u32 %v508, %v511
        %v513 = vrot.slane %v512, 4
        %v515 = vshll.u32 %v459, 16
        %v517 = vrot.slane %v515, 5
        %v518 = vsel %vm462, %v513, %v517
        %v519 = vunpack.c.l.b16 %v476
        %v520 = vunpack.c.l.b16 %v490
        %v521 = vunpack.c.l.b16 %v504
        %v522 = vunpack.c.l.b16 %v518
        %v523 = vpack.c.b16 %v520, %v519
        %v524 = vpack.c.b16 %v522, %v521
        %525 = vrot.lane.b32.xlu0 %v523, 16
        %v526 = vpop.permute.xlu0 %525
        %527 = vrot.lane.b32.xlu0 %v524, 16
        %v528 = vpop.permute.xlu0 %527
        %vm531 = vcmask 261248
        %532 = vst.msk [vmem:[#allocation3] sm:$0xff] %vm531, %v526
        %533 = vst.msk [vmem:[#allocation3 + $0x8] sm:$0xff] %vm531, %v528
        %s534 = scalar_lea.vmem [#allocation2], 8
        %v535 = vld [vmem:[%s534] sm:$0xf]
        %v536 = vld [vmem:[%s534 + $0x8] sm:$0xf]
        %v537 = vld [vmem:[%s534 + $0x10] sm:$0xf]
        %v538 = vld [vmem:[%s534 + $0x18] sm:$0xf]
        %v543 = vunpack.c.l.b16 %v535
        %v544 = vunpack.c.l.b16 %v536
        %v545 = vunpack.c.l.b16 %v537
        %v546 = vunpack.c.l.b16 %v538
        %v547 = vpack.c.b16 %v544, %v543
        %v548 = vpack.c.b16 %v546, %v545
        %549 = vrot.lane.b32.xlu0 %v547, 32
        %v550 = vpop.permute.xlu0 %549
        %551 = vrot.lane.b32.xlu0 %v548, 32
        %v552 = vpop.permute.xlu0 %551
        %vm555 = vcmask 392448
        %556 = vst.msk [vmem:[#allocation3] sm:$0xff] %vm555, %v550
        %557 = vst.msk [vmem:[#allocation3 + $0x8] sm:$0xff] %vm555, %v552
        %v558 = vld [vmem:[%s534] sm:$0x1f]
        %v559 = vld [vmem:[%s534 + $0x8] sm:$0x1f]
        %v560 = vld [vmem:[%s534 + $0x10] sm:$0x1f]
        %v561 = vld [vmem:[%s534 + $0x18] sm:$0x1f]
        %v566 = vunpack.c.l.b16 %v558
        %v567 = vunpack.c.h.b16 %v558
        %v568 = vunpack.c.l.b16 %v559
        %v569 = vunpack.c.h.b16 %v559
        %v570 = vunpack.c.l.b16 %v560
        %v571 = vunpack.c.h.b16 %v560
        %v572 = vunpack.c.l.b16 %v561
        %v573 = vunpack.c.h.b16 %v561
        %v574 = vpack.c.b16 %v566, %v566
        %v575 = vpack.c.b16 %v567, %v567
        %v576 = vpack.c.b16 %v568, %v568
        %v577 = vpack.c.b16 %v569, %v569
        %v578 = vpack.c.b16 %v570, %v570
        %v579 = vpack.c.b16 %v571, %v571
        %v580 = vpack.c.b16 %v572, %v572
        %v581 = vpack.c.b16 %v573, %v573
        %v583 = vshrl.u32 %v574, 16
        %v585 = vrot.slane %v583, 4
        %v586 = vshll.u32 %v574, 16
        %v588 = vrot.slane %v586, 5
        %v589 = vor.u32 %v585, %v588
        %v590 = vrot.slane %v589, 4
        %v592 = vshll.u32 %v575, 16
        %v594 = vrot.slane %v592, 5
        %v595 = vsel %vm462, %v590, %v594
        %v597 = vshrl.u32 %v576, 16
        %v599 = vrot.slane %v597, 4
        %v600 = vshll.u32 %v576, 16
        %v602 = vrot.slane %v600, 5
        %v603 = vor.u32 %v599, %v602
        %v604 = vrot.slane %v603, 4
        %v606 = vshll.u32 %v577, 16
        %v608 = vrot.slane %v606, 5
        %v609 = vsel %vm462, %v604, %v608
        %v611 = vshrl.u32 %v578, 16
        %v613 = vrot.slane %v611, 4
        %v614 = vshll.u32 %v578, 16
        %v616 = vrot.slane %v614, 5
        %v617 = vor.u32 %v613, %v616
        %v618 = vrot.slane %v617, 4
        %v620 = vshll.u32 %v579, 16
        %v622 = vrot.slane %v620, 5
        %v623 = vsel %vm462, %v618, %v622
        %v625 = vshrl.u32 %v580, 16
        %v627 = vrot.slane %v625, 4
        %v628 = vshll.u32 %v580, 16
        %v630 = vrot.slane %v628, 5
        %v631 = vor.u32 %v627, %v630
        %v632 = vrot.slane %v631, 4
        %v634 = vshll.u32 %v581, 16
        %v636 = vrot.slane %v634, 5
        %v637 = vsel %vm462, %v632, %v636
        %v638 = vunpack.c.l.b16 %v595
        %v639 = vunpack.c.l.b16 %v609
        %v640 = vunpack.c.l.b16 %v623
        %v641 = vunpack.c.l.b16 %v637
        %v642 = vpack.c.b16 %v639, %v638
        %v643 = vpack.c.b16 %v641, %v640
        %644 = vrot.lane.b32.xlu0 %v642, 48
        %v645 = vpop.permute.xlu0 %644
        %646 = vrot.lane.b32.xlu0 %v643, 48
        %v647 = vpop.permute.xlu0 %646
        %vm650 = vcmask 523648
        %651 = vst.msk [vmem:[#allocation3] sm:$0xff] %vm650, %v645
        %652 = vst.msk [vmem:[#allocation3 + $0x8] sm:$0xff] %vm650, %v647
        %v653 = vld [vmem:[#allocation3] sm:$0xff]
        %v654 = vld [vmem:[#allocation3 + $0x8] sm:$0xff]
        %v655 = vld [vmem:[#allocation9] sm:$0xf]
        %v656 = vld [vmem:[#allocation9 + $0x4] sm:$0xf]
        %v657 = vld [vmem:[#allocation9 + $0x8] sm:$0xf]
        %v658 = vld [vmem:[#allocation9 + $0xc] sm:$0xf]
        %v659 = vld [vmem:[#allocation9 + $0x10] sm:$0xf]
        %v660 = vld [vmem:[#allocation9 + $0x14] sm:$0xf]
        %v661 = vld [vmem:[#allocation9 + $0x18] sm:$0xf]
        %v662 = vld [vmem:[#allocation9 + $0x1c] sm:$0xf]
        %v671 = vunpack.c.l.b16 %v655
        %v672 = vunpack.c.l.b16 %v656
        %v673 = vunpack.c.l.b16 %v657
        %v674 = vunpack.c.l.b16 %v658
        %v675 = vunpack.c.l.b16 %v659
        %v676 = vunpack.c.l.b16 %v660
        %v677 = vunpack.c.l.b16 %v661
        %v678 = vunpack.c.l.b16 %v662
        %v679 = vpack.c.b16 %v672, %v671
        %v680 = vpack.c.b16 %v674, %v673
        %v681 = vpack.c.b16 %v676, %v675
        %v682 = vpack.c.b16 %v678, %v677
        %vm687 = vcmask 523264
        %v689 = vsel %vm687, %v653, 0
        %v692 = vsel %vm687, %v654, 0
        %694 = vmatprep.subr.bf16.mxu0 0
        %695 = vmatpush1.bf16.msra.mxu0 %v679
        %696 = vmatprep.subr.bf16.mxu0 0
        %697 = vmatpush1.bf16.msra.mxu0 %v680
        %698 = vmatprep.subr.bf16.mxu0 0
        %699 = vmatpush1.bf16.msra.mxu0 %v681
        %700 = vmatprep.subr.bf16.mxu0 0
        %701 = vmatpush1.bf16.msra.mxu0 %v682
        %702 = vmatprep.subr.bf16.mxu0 0
        %703 = vmatpush1.bf16.msra.mxu0 0
        %704 = vmatprep.subr.bf16.mxu0 0
        %705 = vmatpush1.bf16.msra.mxu0 0
        %706 = vmatprep.subr.bf16.mxu0 0
        %707 = vmatpush1.bf16.msra.mxu0 0
        %708 = vmatprep.subr.bf16.mxu0 0
        %709 = vmatpush1.bf16.msra.mxu0 0
        %710 = vmatprep.subr.bf16.mxu0 0
        %711 = vmatpush1.bf16.msra.mxu0 0
        %712 = vmatprep.subr.bf16.mxu0 0
        %713 = vmatpush1.bf16.msra.mxu0 0
        %714 = vmatprep.subr.bf16.mxu0 0
        %715 = vmatpush1.bf16.msra.mxu0 0
        %716 = vmatprep.subr.bf16.mxu0 0
        %717 = vmatpush1.bf16.msra.mxu0 0
        %718 = vmatprep.subr.bf16.mxu0 0
        %719 = vmatpush1.bf16.msra.mxu0 0
        %720 = vmatprep.subr.bf16.mxu0 0
        %721 = vmatpush1.bf16.msra.mxu0 0
        %722 = vmatprep.subr.bf16.mxu0 0
        %723 = vmatpush1.bf16.msra.mxu0 0
        %724 = vmatprep.subr.bf16.mxu0 0
        %725 = vmatpush1.bf16.msra.mxu0 0
        %726 = vmatprep.mubr.bf16.mxu0 0
        %727 = vmatmul.mubr.bf16.gmra.mrb[0].mxu0 %v689
        %v728 = vpop.f32.mrb[0].mxu0
        %v729 = vadd.f32 0.0, %v728
        %v730 = vpop.f32.mrb[0].mxu0
        %v731 = vpop.f32.mrb[0].mxu0
        %v732 = vadd.f32 0.0, %v731
        %v733 = vpop.f32.mrb[0].mxu0
        %734 = vmatprep.mubr.bf16.mxu0 0
        %735 = vmatmul.mubr.bf16.gmra.mrb[0].mxu0 %v692
        %v736 = vpop.f32.mrb[0].mxu0
        %v737 = vadd.f32 0.0, %v736
        %v738 = vpop.f32.mrb[0].mxu0
        %v739 = vpop.f32.mrb[0].mxu0
        %v740 = vadd.f32 0.0, %v739
        %v741 = vpop.f32.mrb[0].mxu0
        %742 = vdwg.mxu0
        %v743 = vpack.c.bf16 %v732, %v729
        %v744 = vpack.c.bf16 %v740, %v737
        %v747 = vunpack.c.l.b16 %v743
        %v748 = vunpack.c.h.b16 %v743
        %v749 = vunpack.c.l.b16 %v744
        %v750 = vunpack.c.h.b16 %v744
        %v751 = vpack.c.b16 %v747, %v747
        %v752 = vpack.c.b16 %v748, %v748
        %v753 = vpack.c.b16 %v749, %v749
        %v754 = vpack.c.b16 %v750, %v750
        %vm759 = vcmask 60416
        %760 = vst.msk [vmem:[%s337] sm:$0xf] %vm759, %v751
        %761 = vst.msk [vmem:[%s337 + $0x4] sm:$0xf] %vm759, %v752
        %762 = vst.msk [vmem:[%s337 + $0x8] sm:$0xf] %vm759, %v753
        %763 = vst.msk [vmem:[%s337 + $0xc] sm:$0xf] %vm759, %v754
        %v764 = vadd.f32 %v729, %v732
        %v765 = vadd.f32 %v764, %v737
        %v766 = vadd.f32 %v765, %v740
        %v767 = vrot.slane %v766, 4
        %v768 = vadd.f32 %v766, %v767
        %v769 = vrot.slane %v768, 2
        %v770 = vadd.f32 %v768, %v769
        %v771 = vrot.slane %v770, 1
        %v772 = vadd.f32 %v770, %v771
        %v773 = vmul.f32 %v729, %v729
        %v774 = vmul.f32 %v732, %v732
        %v775 = vmul.f32 %v737, %v737
        %v776 = vmul.f32 %v740, %v740
        %v777 = vadd.f32 %v773, %v774
        %v778 = vadd.f32 %v777, %v775
        %v779 = vadd.f32 %v778, %v776
        %v780 = vrot.slane %v779, 4
        %v781 = vadd.f32 %v779, %v780
        %v782 = vrot.slane %v781, 2
        %v783 = vadd.f32 %v781, %v782
        %v784 = vrot.slane %v783, 1
        %v785 = vadd.f32 %v783, %v784
        %786 = vst [vmem:[%s320] sm:$0x1] %v772
        %787 = vst [vmem:[%s320 + $0x1] sm:$0x1] %v785
        %s788 = smul.u32 4, %s30
        %p789 = scmp.lt.s32.totalorder %s29, 1
        %s790 = scalar_select %p789, %s29, 1
        %p791 = scmp.lt.s32.totalorder %s788, 7
        %s792 = scalar_select %p791, %s788, 7
        %s793 = smul.addr %s790, 8
        %s794 = sadd.s32 %s792, %s793
        %s795 = smul.addr %s794, 4
        %s796 = scalar_lea.vmem %s3, %s795
        %s797 = sand.u32 %s156, 1
        %s798 = scalar_lea.sflag [#allocation6], %s797
        %s799 = sand.u32 %s156, 1
        %s800 = smul.addr %s799, 2
        %s801 = scalar_lea.vmem [#allocation10], %s800
        // Predicated region
        $region45: #{tpu_custom_call.1} parent=31 // pred_check
          %p802 = pneg %p138
        $region46: #{tpu_custom_call.1} parent=31 // pred_check_branch
          %804 = sbr.rel (%p802) target = $region48
        $region47: #{tpu_custom_call.1} parent=31 // pred_region
          %s805 = smul.u32 4, %s30
        $region48: #{tpu_custom_call.1} parent=31 // pred_fallthru
          _
        // Predicated region
        $region49: #{tpu_custom_call.1} parent=31 // pred_check
          %p806 = pneg %p166
        $region50: #{tpu_custom_call.1} parent=31 // pred_check_branch
          %808 = sbr.rel (%p806) target = $region52
        $region51: #{tpu_custom_call.1} parent=31 // pred_region
          %s810 = ssub.s32 32, 32
          %811 = vsyncadd %s798, %s810
          %s812 = smul.addr %s29, 2
          %s813 = sadd.s32 %s30, %s812
          %s814 = smul.addr %s813, 32
          %s815 = scalar_lea.hbm %s4, %s814
          %s817 = sshll.u32 %s801, 4
          %s818 = int_to_ptr.vmem [resolvable:$true] %s817
          %820 = dma.vmem_to_hbm [thread:$0]  %s818, 32, %s815, %s798
        $region52: #{tpu_custom_call.1} parent=31 // pred_fallthru
          _
      $region32: #{tpu_custom_call.1} parent=5 // pred_fallthru
        _
      %p821 = scmp.le.s32.totalorder 2, %s20
      // Predicated region
      $region53: #{tpu_custom_call.1} parent=5 // pred_check
        %p822 = pneg %p821
      $region54: #{tpu_custom_call.1} parent=5 // pred_check_branch
        %824 = sbr.rel (%p822) target = $region56
      $region55: #{tpu_custom_call.1} parent=5 // pred_region
        %s825 = ssub.s32 %s20, 2
        // Predicated region
        $region57: #{tpu_custom_call.1} parent=55 // pred_check
          %p826 = pneg %p144
        $region58: #{tpu_custom_call.1} parent=55 // pred_check_branch
          %828 = sbr.rel (%p826) target = $region60
        $region59: #{tpu_custom_call.1} parent=55 // pred_region
          %s829 = smul.u32 4, %s32
          %p830 = scmp.lt.s32.totalorder %s31, 1
          %s831 = scalar_select %p830, %s31, 1
          %p832 = scmp.lt.s32.totalorder %s829, 7
          %s833 = scalar_select %p832, %s829, 7
          %s834 = smul.addr %s831, 8
          %s835 = sadd.s32 %s833, %s834
          %s836 = smul.addr %s835, 4
          %s837 = scalar_lea.vmem %s3, %s836
        $region60: #{tpu_custom_call.1} parent=55 // pred_fallthru
          _
        // Predicated region
        $region61: #{tpu_custom_call.1} parent=55 // pred_check
          %p838 = pneg %p172
        $region62: #{tpu_custom_call.1} parent=55 // pred_check_branch
          %840 = sbr.rel (%p838) target = $region64
        $region63: #{tpu_custom_call.1} parent=55 // pred_region
          %s841 = sand.u32 %s157, 1
          %s842 = scalar_lea.sflag [#allocation6], %s841
          %s843 = sand.u32 %s157, 1
          %s844 = smul.addr %s843, 2
          %s845 = scalar_lea.vmem [#allocation10], %s844
          %846 = dma.done %s842, 32
        $region64: #{tpu_custom_call.1} parent=55 // pred_fallthru
          _
      $region56: #{tpu_custom_call.1} parent=5 // pred_fallthru
        _
    $region6: #{tpu_custom_call.1} parent=1 // loop_footer
      %s24 = sadd.s32 1, %s20
    $region7: #{tpu_custom_call.1} parent=1 // loop_footer_branch
      %19 = sbr.rel target = $region3
    $region8: #{tpu_custom_call.1} parent=1 // loop_exit
      _
    %847 = vsyncpa [#allocation5], 1
    %s848 = scalar_lea.sflag [#allocation5], 1
    %849 = vsyncpa %s848, 1
    %850 = vsyncpa [#allocation8], 1
    %s851 = scalar_lea.sflag [#allocation8], 1
    %852 = vsyncpa %s851, 1
    %853 = vsyncpa [#allocation6], 1
    %s854 = scalar_lea.sflag [#allocation6], 1
    %855 = vsyncpa %s854, 1

</llo_original>
